<compile_context>
chip_gen: v7x
topology: tpu7x:2x2x1
jax: 0.10.0
libtpu: 0.0.40
codegen_flags: <defaults>
</compile_context>

<pallas_src>
import functools
import math

import jax
import jax.numpy as jnp
from jax.experimental import pallas as pl
from jax.experimental.pallas import tpu as pltpu


def _round_up(x, m):
    return ((x + m - 1) // m) * m


def _nlk_offset_intersection_kernel(emb_ref, w1t_ref, b1_ref, w2t_ref, b2_ref,
                                    out_ref, *, matmul_dtype):
    # emb_ref : (N, TB, 2*D)  current batch-block slab
    # w1t_ref : (2*D, H)      layer1 weight, pre-transposed
    # b1_ref  : (1, H)
    # w2t_ref : (H, D)        layer2 weight, pre-transposed
    # b2_ref  : (1, D)
    # out_ref : (TB, D)
    n, tb, d2 = emb_ref.shape
    d = d2 // 2

    x = emb_ref[...]                                             # (N, TB, 2D)

    # layer1 + relu on a collapsed (N*TB, 2D) LHS -> one large MXU matmul.
    lhs = x.reshape(n * tb, d2).astype(matmul_dtype)
    h = jnp.dot(lhs, w1t_ref[...].astype(matmul_dtype),
                preferred_element_type=jnp.float32) + b1_ref[...]
    h = jnp.maximum(h, 0.0)                                      # (N*TB, H)

    # mean over N (torch dim=0): N is outermost -> elementwise VPU adds.
    h_mean = jnp.sum(h.reshape(n, tb, -1), axis=0) * (1.0 / n)   # (TB, H)

    # layer2 -> sigmoid gate (exp on EUP).
    logits = jnp.dot(h_mean.astype(matmul_dtype),
                     w2t_ref[...].astype(matmul_dtype),
                     preferred_element_type=jnp.float32) + b2_ref[...]  # (TB, D)
    gate = 1.0 / (1.0 + jnp.exp(-logits))

    # offset = elementwise min over N of the offset half of the embedding.
    offset = jnp.min(x[:, :, d:], axis=0)                        # (TB, D)

    out_ref[...] = offset * gate


def nlk_offset_intersection(emb, w1, b1, w2, b2, *, tb=None,
                            matmul_dtype=jnp.float32):
    """emb: (N, B, 2*dim) f32.  w1: (H, 2*dim), b1: (H,), w2: (dim, H), b2: (dim,).
    Returns (B, dim) = min_N(offset_half(emb)) * sigmoid(layer2(mean_N(relu(layer1(emb)))))."""
    N, B, D2 = emb.shape
    D = D2 // 2
    H = w1.shape[0]

    if tb is None:
        # Sublane-aligned batch tile; keep the double-buffered emb slab well
        # inside the default VMEM budget (~8 MiB per buffer).
        budget_rows = max(8, (8 << 20) // max(1, N * D2 * 4))
        tb = min(_round_up(B, 8), _round_up(min(budget_rows, 512), 8))
    n_blocks = pl.cdiv(B, tb)
    Bp = n_blocks * tb
    if Bp != B:
        # Pad the batch axis; padded rows are computed but sliced off below.
        # Reductions are over N only, so they never contaminate real rows.
        emb = jnp.pad(emb, ((0, 0), (0, Bp - B), (0, 0)))

    # Glue: layout-only transforms on the tiny weight tensors.
    w1t = jnp.transpose(w1)             # (2D, H)
    w2t = jnp.transpose(w2)             # (H, D)
    b1_2d = b1.reshape(1, H)
    b2_2d = b2.reshape(1, D)

    kernel = functools.partial(_nlk_offset_intersection_kernel,
                               matmul_dtype=matmul_dtype)

    out = pl.pallas_call(
        kernel,
        out_shape=jax.ShapeDtypeStruct((Bp, D), jnp.float32),
        grid_spec=pltpu.PrefetchScalarGridSpec(
            num_scalar_prefetch=0,
            grid=(n_blocks,),
            in_specs=[
                # emb slab: full N, TB batches, full feature dim, tiled
                # directly from the native (N, B, 2D) layout.
                pl.BlockSpec((N, tb, D2), lambda b: (0, b, 0)),
                # Resident weights / biases (constant index maps).
                pl.BlockSpec((D2, H), lambda b: (0, 0)),
                pl.BlockSpec((1, H), lambda b: (0, 0)),
                pl.BlockSpec((H, D), lambda b: (0, 0)),
                pl.BlockSpec((1, D), lambda b: (0, 0)),
            ],
            # Lane-dense (TB, D) output slab per step.
            out_specs=pl.BlockSpec((tb, D), lambda b: (b, 0)),
        ),
        compiler_params=pltpu.CompilerParams(
            # Batch-block axis is independent -> shards across the 2 TCs on v7x.
            dimension_semantics=("parallel",),
        ),
        # TODO(synk): at production N/D/H sizes, bump vmem_limit_bytes and
        # single-buffer the constant weight specs so larger TB slabs fit
        # v7x's 64 MiB VMEM; unnecessary at these sizes.
    )(emb, w1t, b1_2d, w2t, b2_2d)

    if Bp != B:
        out = out[:B]
    return out


def _init_params(key, dim, hidden_dim):
    """Deterministic init matching nn.Linear + xavier_uniform_ on weights."""
    k1, k2, k3, k4 = jax.random.split(key, 4)

    # layer1: Linear(2*dim, hidden_dim)
    bnd1 = math.sqrt(6.0 / (2 * dim + hidden_dim))
    w1 = jax.random.uniform(k1, (hidden_dim, 2 * dim), jnp.float32, -bnd1, bnd1)
    bb1 = 1.0 / math.sqrt(2 * dim)
    b1 = jax.random.uniform(k3, (hidden_dim,), jnp.float32, -bb1, bb1)

    # layer2: Linear(hidden_dim, dim)
    bnd2 = math.sqrt(6.0 / (hidden_dim + dim))
    w2 = jax.random.uniform(k2, (dim, hidden_dim), jnp.float32, -bnd2, bnd2)
    bb2 = 1.0 / math.sqrt(hidden_dim)
    b2 = jax.random.uniform(k4, (dim,), jnp.float32, -bb2, bb2)
    return w1, b1, w2, b2


def _reference(emb, w1, b1, w2, b2):
    d = emb.shape[-1] // 2
    offset_emb = emb[..., d:]
    h = jnp.maximum(jnp.einsum("nbk,hk->nbh", emb, w1) + b1, 0.0)
    h_mean = jnp.mean(h, axis=0)
    gate = jax.nn.sigmoid(jnp.einsum("bh,dh->bd", h_mean, w2) + b2)
    offset = jnp.min(offset_emb, axis=0)
    return offset * gate


if __name__ == "__main__":
    N, B, DIM, HIDDEN = 8, 16, 32, 64   # embeddings feature dim is 2*DIM = 64
    TB = 8                              # 2 grid steps: exercises batching + megacore path

    key = jax.random.PRNGKey(0)
    k_emb, k_par = jax.random.split(key)
    emb = jax.random.normal(k_emb, (N, B, 2 * DIM), jnp.float32)
    w1, b1, w2, b2 = _init_params(k_par, DIM, HIDDEN)

    out = nlk_offset_intersection(emb, w1, b1, w2, b2, tb=TB)
    out = jax.block_until_ready(out)

    ref = jax.block_until_ready(_reference(emb, w1, b1, w2, b2))
    assert out.shape == (B, DIM)
    assert jnp.allclose(out, ref, atol=1e-5, rtol=1e-5), "mismatch vs reference"

    print("KERNEL_OK")
</pallas_src>

<mosaic_0001>
module attributes {stable_mosaic.version = 11 : i64} {
  func.func @_nlk_offset_intersection_kernel(%arg0: i32, %arg1: memref<8x8x64xf32, #tpu.memory_space<vmem>>, %arg2: memref<64x64xf32, #tpu.memory_space<vmem>>, %arg3: memref<1x64xf32, #tpu.memory_space<vmem>>, %arg4: memref<64x32xf32, #tpu.memory_space<vmem>>, %arg5: memref<1x32xf32, #tpu.memory_space<vmem>>, %arg6: memref<8x32xf32, #tpu.memory_space<vmem>>) attributes {dimension_semantics = [#tpu.dimension_semantics<parallel>], iteration_bounds = array<i64: 2>, scalar_prefetch = 0 : i64, scratch_operands = 0 : i64, tpu.core_type = #tpu.core_type<tc>, window_params = [{transform_indices = @transform_0, window_bounds = array<i64: 8, 8, 64>}, {pipeline_mode = #tpu.pipeline_mode<synchronous>, transform_indices = @transform_1, window_bounds = array<i64: 64, 64>}, {pipeline_mode = #tpu.pipeline_mode<synchronous>, transform_indices = @transform_2, window_bounds = array<i64: 1, 64>}, {pipeline_mode = #tpu.pipeline_mode<synchronous>, transform_indices = @transform_3, window_bounds = array<i64: 64, 32>}, {pipeline_mode = #tpu.pipeline_mode<synchronous>, transform_indices = @transform_4, window_bounds = array<i64: 1, 32>}, {transform_indices = @transform_5, window_bounds = array<i64: 8, 32>}]} {
    %c0 = arith.constant 0 : index
    %c0_0 = arith.constant 0 : index
    %c0_1 = arith.constant 0 : index
    %0 = vector.load %arg1[%c0, %c0_0, %c0_1] : memref<8x8x64xf32, #tpu.memory_space<vmem>>, vector<8x8x64xf32>
    %1 = vector.shape_cast %0 : vector<8x8x64xf32> to vector<64x64xf32>
    %c0_2 = arith.constant 0 : index
    %c0_3 = arith.constant 0 : index
    %2 = vector.load %arg2[%c0_2, %c0_3] : memref<64x64xf32, #tpu.memory_space<vmem>>, vector<64x64xf32>
    %cst = arith.constant dense<0.000000e+00> : vector<64x64xf32>
    %3 = tpu.matmul %1, %2, %cst {dimension_numbers = #tpu.dot_dimension_numbers<[1], [0], [0], [1], [0, 0, 1, 1], [], []>} : vector<64x64xf32>, vector<64x64xf32>, vector<64x64xf32> -> vector<64x64xf32>
    %c0_4 = arith.constant 0 : index
    %c0_5 = arith.constant 0 : index
    %4 = vector.load %arg3[%c0_4, %c0_5] : memref<1x64xf32, #tpu.memory_space<vmem>>, vector<1x64xf32>
    %5 = vector.broadcast %4 : vector<1x64xf32> to vector<64x64xf32>
    %6 = arith.addf %3, %5 : vector<64x64xf32>
    %cst_6 = arith.constant 0.000000e+00 : f32
    %7 = vector.broadcast %cst_6 : f32 to vector<64x64xf32>
    %8 = arith.maximumf %6, %7 : vector<64x64xf32>
    %9 = vector.shape_cast %8 : vector<64x64xf32> to vector<8x8x64xf32>
    %cst_7 = arith.constant dense<0.000000e+00> : vector<8x64xf32>
    %10 = vector.multi_reduction <add>, %9, %cst_7 [0] : vector<8x8x64xf32> to vector<8x64xf32>
    %cst_8 = arith.constant 1.250000e-01 : f32
    %11 = vector.broadcast %cst_8 : f32 to vector<8x64xf32>
    %12 = arith.mulf %10, %11 : vector<8x64xf32>
    %c0_9 = arith.constant 0 : index
    %c0_10 = arith.constant 0 : index
    %13 = vector.load %arg4[%c0_9, %c0_10] : memref<64x32xf32, #tpu.memory_space<vmem>>, vector<64x32xf32>
    %cst_11 = arith.constant dense<0.000000e+00> : vector<8x32xf32>
    %14 = tpu.matmul %12, %13, %cst_11 {dimension_numbers = #tpu.dot_dimension_numbers<[1], [0], [0], [1], [0, 0, 1, 1], [], []>} : vector<8x64xf32>, vector<64x32xf32>, vector<8x32xf32> -> vector<8x32xf32>
    %c0_12 = arith.constant 0 : index
    %c0_13 = arith.constant 0 : index
    %15 = vector.load %arg5[%c0_12, %c0_13] : memref<1x32xf32, #tpu.memory_space<vmem>>, vector<1x32xf32>
    %16 = vector.broadcast %15 : vector<1x32xf32> to vector<8x32xf32>
    %17 = arith.addf %14, %16 : vector<8x32xf32>
    %cst_14 = arith.constant 0.000000e+00 : f32
    %18 = vector.broadcast %cst_14 : f32 to vector<8x32xf32>
    %19 = arith.subf %18, %17 : vector<8x32xf32>
    %20 = math.exp %19 : vector<8x32xf32>
    %cst_15 = arith.constant 1.000000e+00 : f32
    %21 = vector.broadcast %cst_15 : f32 to vector<8x32xf32>
    %22 = arith.addf %21, %20 : vector<8x32xf32>
    %cst_16 = arith.constant 1.000000e+00 : f32
    %23 = vector.broadcast %cst_16 : f32 to vector<8x32xf32>
    %24 = arith.divf %23, %22 : vector<8x32xf32>
    %25 = vector.extract_strided_slice %0 {offsets = [0, 0, 32], sizes = [8, 8, 32], strides = [1, 1, 1]} : vector<8x8x64xf32> to vector<8x8x32xf32>
    %cst_17 = arith.constant dense<0x7F800000> : vector<8x32xf32>
    %26 = vector.multi_reduction <minimumf>, %25, %cst_17 [0] : vector<8x8x32xf32> to vector<8x32xf32>
    %27 = arith.mulf %26, %24 : vector<8x32xf32>
    %c0_18 = arith.constant 0 : index
    %c0_19 = arith.constant 0 : index
    %28 = vector.load %arg6[%c0_18, %c0_19] : memref<8x32xf32, #tpu.memory_space<vmem>>, vector<8x32xf32>
    tpu.vector_store %arg6[%c0_18, %c0_19], %27 {strides = array<i32>} : memref<8x32xf32, #tpu.memory_space<vmem>>, vector<8x32xf32>,
    return
  }
  func.func @transform_0(%arg0: i32) -> (i32, i32, i32) {
    %c0_i32 = arith.constant 0 : i32
    %c0_i32_0 = arith.constant 0 : i32
    %c0_i32_1 = arith.constant 0 : i32
    return %c0_i32, %arg0, %c0_i32_0 : i32, i32, i32
  }
  func.func @transform_1(%arg0: i32) -> (i32, i32) {
    %c0_i32 = arith.constant 0 : i32
    %c0_i32_0 = arith.constant 0 : i32
    %c0_i32_1 = arith.constant 0 : i32
    return %c0_i32, %c0_i32_0 : i32, i32
  }
  func.func @transform_2(%arg0: i32) -> (i32, i32) {
    %c0_i32 = arith.constant 0 : i32
    %c0_i32_0 = arith.constant 0 : i32
    %c0_i32_1 = arith.constant 0 : i32
    return %c0_i32, %c0_i32_0 : i32, i32
  }
  func.func @transform_3(%arg0: i32) -> (i32, i32) {
    %c0_i32 = arith.constant 0 : i32
    %c0_i32_0 = arith.constant 0 : i32
    %c0_i32_1 = arith.constant 0 : i32
    return %c0_i32, %c0_i32_0 : i32, i32
  }
  func.func @transform_4(%arg0: i32) -> (i32, i32) {
    %c0_i32 = arith.constant 0 : i32
    %c0_i32_0 = arith.constant 0 : i32
    %c0_i32_1 = arith.constant 0 : i32
    return %c0_i32, %c0_i32_0 : i32, i32
  }
  func.func @transform_5(%arg0: i32) -> (i32, i32) {
    %c0_i32 = arith.constant 0 : i32
    %c0_i32_0 = arith.constant 0 : i32
    return %arg0, %c0_i32 : i32, i32
  }
}

</mosaic_0001>

<llo_original>
// kernel: tpu_custom_call.1
$region0: #{tpu_custom_call.1}
  #allocation0 [shape = 'u32[]', space=smem, size = 0x4, offset = 0x4, fixed_abs, tag = 'smem constant byte address 0x4 - core index']
  #allocation1 [shape = 'u32[144,128]{1,0:T(1,128)}', space=vmem, size = 0x12000, scoped, tag = 'internal scratch']
  %s0 = inlined_call_operand.hbm [shape: f32[8,16,64], index: 0, kind: input, shape index: {}]
  %s1 = inlined_call_operand.vmem [shape: f32[64,64], index: 1, kind: input, shape index: {}]
  %s2 = inlined_call_operand.vmem [shape: f32[1,64], index: 2, kind: input, shape index: {}]
  %s3 = inlined_call_operand.vmem [shape: f32[64,32], index: 3, kind: input, shape index: {}]
  %s4 = inlined_call_operand.vmem [shape: f32[1,32], index: 4, kind: input, shape index: {}]
  %s5 = inlined_call_operand.hbm [shape: f32[16,32], index: 5, kind: output, shape index: {}]
  %s6 = sld [smem:[#allocation0]]
  $region57: #{tpu_custom_call.1} parent=0
    _
  %s8 = ssub.s32 1, %s6
  %s9 = scalar_select 0, %s8, %s6
  $region1: #{tpu_custom_call.1} parent=0
    #allocation2 [shape = 'u8[65536]{0}', space=vmem, size = 0x10000, scoped, tag = 'input window, operand 0']
    #allocation3 [shape = 's32[2]{0}', space=sflag, size = 0x8, scoped, tag = 'scoped memory for tpu_custom_call.1']
    #allocation4 [shape = 's32[2]{0}', space=sflag, size = 0x8, scoped, tag = 'scoped memory for tpu_custom_call.1']
    #allocation5 [shape = 'u8[8192]{0}', space=vmem, size = 0x2000, scoped, tag = 'output window, operand 0']
    %10 = vsyncpa [#allocation3], 0
    %s11 = scalar_lea.sflag [#allocation3], 1
    %12 = vsyncpa %s11, 0
    %13 = vsyncpa [#allocation4], 0
    %s14 = scalar_lea.sflag [#allocation4], 1
    %15 = vsyncpa %s14, 0
    loop: start=0, step=1, limit=4
    $region2: #{tpu_custom_call.1} parent=1 // loop_pre_header
      _
    $region3: #{tpu_custom_call.1} parent=1 // loop_header
      %s17 = sphi 0, %s21
      %p18 = scmp.ge.s32.totalorder %s17, 4
      %s27 = sphi 0, %s29
      %s30 = sphi 0, %s27
      %s31 = sphi 0, %s30
      %s47 = sphi 0, %s31
      %s51 = sphi 0, %s51
      %s53 = sphi 0, %s51
      %s54 = sphi 0, %s53
      %s68 = sphi 0, %s54
      %s72 = sphi 0, %s72
      %s74 = sphi 0, %s72
      %s75 = sphi 0, %s74
      %s89 = sphi 0, %s75
      %s93 = sphi 0, %s93
      %s95 = sphi 0, %s93
      %s96 = sphi 0, %s95
      %s110 = sphi 0, %s96
      %s114 = sphi 0, %s114
      %s116 = sphi 0, %s114
      %s117 = sphi 0, %s116
      %s131 = sphi 0, %s117
      %s137 = sphi 0, %s139
      %s140 = sphi 0, %s137
      %s141 = sphi 0, %s140
      %s157 = sphi 0, %s141
    $region4: #{tpu_custom_call.1} parent=1 // loop_header_branch
      %20 = sbr.rel (%p18) target = $region8
    $region5: #{tpu_custom_call.1} parent=1 // loop_body
      %s22 = ssub.s32 %s17, 1
      %s23 = ssub.s32 %s17, 2
      %s24 = sadd.s32 %s17, 1
      %s25 = ssub.s32 %s17, %s24
      %p26 = scmp.eq.s32.totalorder %s25, 0
      %s28 = sadd.s32 %s27, 1
      %s29 = scalar_select %p26, %s27, %s28
      %p32 = pneg %p26
      %p33 = scmp.eq.s32.totalorder %s17, 1
      %p34 = por %p32, %p33
      %p35 = scmp.ne.s32.totalorder %s27, %s30
      %p36 = scmp.eq.s32.totalorder %s17, 0
      %p37 = por %p35, %p36
      %p38 = scmp.ne.s32.totalorder %s27, %s30
      %p39 = scmp.eq.s32.totalorder %s22, 1
      %p40 = por %p38, %p39
      %p41 = scmp.ne.s32.totalorder %s30, %s31
      %p42 = scmp.eq.s32.totalorder %s22, 0
      %p43 = por %p41, %p42
      %p44 = scmp.ne.s32.totalorder %s30, %s31
      %p45 = scmp.eq.s32.totalorder %s23, 1
      %p46 = por %p44, %p45
      %p48 = scmp.ne.s32.totalorder %s31, %s47
      %p49 = scmp.eq.s32.totalorder %s23, 0
      %p50 = por %p48, %p49
      %s52 = sadd.s32 %s51, 1
      %p55 = scmp.eq.s32.totalorder %s17, 1
      %p56 = scmp.ne.s32.totalorder %s51, %s53
      %p57 = scmp.eq.s32.totalorder %s17, 0
      %p58 = por %p56, %p57
      %p59 = scmp.ne.s32.totalorder %s51, %s53
      %p60 = scmp.eq.s32.totalorder %s22, 1
      %p61 = por %p59, %p60
      %p62 = scmp.ne.s32.totalorder %s53, %s54
      %p63 = scmp.eq.s32.totalorder %s22, 0
      %p64 = por %p62, %p63
      %p65 = scmp.ne.s32.totalorder %s53, %s54
      %p66 = scmp.eq.s32.totalorder %s23, 1
      %p67 = por %p65, %p66
      %p69 = scmp.ne.s32.totalorder %s54, %s68
      %p70 = scmp.eq.s32.totalorder %s23, 0
      %p71 = por %p69, %p70
      %s73 = sadd.s32 %s72, 1
      %p76 = scmp.eq.s32.totalorder %s17, 1
      %p77 = scmp.ne.s32.totalorder %s72, %s74
      %p78 = scmp.eq.s32.totalorder %s17, 0
      %p79 = por %p77, %p78
      %p80 = scmp.ne.s32.totalorder %s72, %s74
      %p81 = scmp.eq.s32.totalorder %s22, 1
      %p82 = por %p80, %p81
      %p83 = scmp.ne.s32.totalorder %s74, %s75
      %p84 = scmp.eq.s32.totalorder %s22, 0
      %p85 = por %p83, %p84
      %p86 = scmp.ne.s32.totalorder %s74, %s75
      %p87 = scmp.eq.s32.totalorder %s23, 1
      %p88 = por %p86, %p87
      %p90 = scmp.ne.s32.totalorder %s75, %s89
      %p91 = scmp.eq.s32.totalorder %s23, 0
      %p92 = por %p90, %p91
      %s94 = sadd.s32 %s93, 1
      %p97 = scmp.eq.s32.totalorder %s17, 1
      %p98 = scmp.ne.s32.totalorder %s93, %s95
      %p99 = scmp.eq.s32.totalorder %s17, 0
      %p100 = por %p98, %p99
      %p101 = scmp.ne.s32.totalorder %s93, %s95
      %p102 = scmp.eq.s32.totalorder %s22, 1
      %p103 = por %p101, %p102
      %p104 = scmp.ne.s32.totalorder %s95, %s96
      %p105 = scmp.eq.s32.totalorder %s22, 0
      %p106 = por %p104, %p105
      %p107 = scmp.ne.s32.totalorder %s95, %s96
      %p108 = scmp.eq.s32.totalorder %s23, 1
      %p109 = por %p107, %p108
      %p111 = scmp.ne.s32.totalorder %s96, %s110
      %p112 = scmp.eq.s32.totalorder %s23, 0
      %p113 = por %p111, %p112
      %s115 = sadd.s32 %s114, 1
      %p118 = scmp.eq.s32.totalorder %s17, 1
      %p119 = scmp.ne.s32.totalorder %s114, %s116
      %p120 = scmp.eq.s32.totalorder %s17, 0
      %p121 = por %p119, %p120
      %p122 = scmp.ne.s32.totalorder %s114, %s116
      %p123 = scmp.eq.s32.totalorder %s22, 1
      %p124 = por %p122, %p123
      %p125 = scmp.ne.s32.totalorder %s116, %s117
      %p126 = scmp.eq.s32.totalorder %s22, 0
      %p127 = por %p125, %p126
      %p128 = scmp.ne.s32.totalorder %s116, %s117
      %p129 = scmp.eq.s32.totalorder %s23, 1
      %p130 = por %p128, %p129
      %p132 = scmp.ne.s32.totalorder %s117, %s131
      %p133 = scmp.eq.s32.totalorder %s23, 0
      %p134 = por %p132, %p133
      %s135 = ssub.s32 %s17, %s24
      %p136 = scmp.eq.s32.totalorder %s135, 0
      %s138 = sadd.s32 %s137, 1
      %s139 = scalar_select %p136, %s137, %s138
      %p142 = pneg %p136
      %p143 = scmp.eq.s32.totalorder %s17, 1
      %p144 = por %p142, %p143
      %p145 = scmp.ne.s32.totalorder %s137, %s140
      %p146 = scmp.eq.s32.totalorder %s17, 0
      %p147 = por %p145, %p146
      %p148 = scmp.ne.s32.totalorder %s137, %s140
      %p149 = scmp.eq.s32.totalorder %s22, 1
      %p150 = por %p148, %p149
      %p151 = scmp.ne.s32.totalorder %s140, %s141
      %p152 = scmp.eq.s32.totalorder %s22, 0
      %p153 = por %p151, %p152
      %p154 = scmp.ne.s32.totalorder %s140, %s141
      %p155 = scmp.eq.s32.totalorder %s23, 1
      %p156 = por %p154, %p155
      %p158 = scmp.ne.s32.totalorder %s141, %s157
      %p159 = scmp.eq.s32.totalorder %s23, 0
      %p160 = por %p158, %p159
      %p161 = scmp.le.s32.totalorder 1, %s17
      %p162 = scmp.lt.s32.totalorder %s17, 3
      %p163 = pnand %p161, %p162
      %p164 = pneg %p163
      // Predicated region
      $region9: #{tpu_custom_call.1} parent=5 // pred_check
        _
      $region10: #{tpu_custom_call.1} parent=5 // pred_check_branch
        %166 = sbr.rel (%p163) target = $region12
      $region11: #{tpu_custom_call.1} parent=5 // pred_region
        %s167 = ssub.s32 %s17, 1
        // Predicated region
        $region13: #{tpu_custom_call.1} parent=11 // pred_check
          %p168 = pneg %p64
        $region14: #{tpu_custom_call.1} parent=11 // pred_check_branch
          %170 = sbr.rel (%p168) target = $region16
        $region15: #{tpu_custom_call.1} parent=11 // pred_region
          _
        $region16: #{tpu_custom_call.1} parent=11 // pred_fallthru
          _
        // Predicated region
        $region17: #{tpu_custom_call.1} parent=11 // pred_check
          %p171 = pneg %p85
        $region18: #{tpu_custom_call.1} parent=11 // pred_check_branch
          %173 = sbr.rel (%p171) target = $region20
        $region19: #{tpu_custom_call.1} parent=11 // pred_region
          _
        $region20: #{tpu_custom_call.1} parent=11 // pred_fallthru
          _
        // Predicated region
        $region21: #{tpu_custom_call.1} parent=11 // pred_check
          %p174 = pneg %p106
        $region22: #{tpu_custom_call.1} parent=11 // pred_check_branch
          %176 = sbr.rel (%p174) target = $region24
        $region23: #{tpu_custom_call.1} parent=11 // pred_region
          _
        $region24: #{tpu_custom_call.1} parent=11 // pred_fallthru
          _
        // Predicated region
        $region25: #{tpu_custom_call.1} parent=11 // pred_check
          %p177 = pneg %p127
        $region26: #{tpu_custom_call.1} parent=11 // pred_check_branch
          %179 = sbr.rel (%p177) target = $region28
        $region27: #{tpu_custom_call.1} parent=11 // pred_region
          _
        $region28: #{tpu_custom_call.1} parent=11 // pred_fallthru
          _
      $region12: #{tpu_custom_call.1} parent=5 // pred_fallthru
        _
      %p180 = scmp.lt.s32.totalorder %s17, 2
      // Predicated region
      $region29: #{tpu_custom_call.1} parent=5 // pred_check
        %p181 = pneg %p180
      $region30: #{tpu_custom_call.1} parent=5 // pred_check_branch
        %183 = sbr.rel (%p181) target = $region32
      $region31: #{tpu_custom_call.1} parent=5 // pred_region
        // Predicated region
        $region33: #{tpu_custom_call.1} parent=31 // pred_check
          %p184 = pneg %p37
        $region34: #{tpu_custom_call.1} parent=31 // pred_check_branch
          %186 = sbr.rel (%p184) target = $region36
        $region35: #{tpu_custom_call.1} parent=31 // pred_region
          %s187 = sand.u32 %s27, 1
          %s188 = scalar_lea.sflag [#allocation3], %s187
          %s189 = sand.u32 %s27, 1
          %s190 = smul.addr %s189, 64
          %s191 = scalar_lea.vmem [#allocation2], %s190
          %s193 = ssub.s32 1024, 1024
          %194 = vsyncadd %s188, %s193
          %s195 = smul.addr %s17, 128
          %s196 = scalar_lea.hbm %s0, %s195
          %s197 = sshll.u32 %s191, 4
          %s198 = int_to_ptr.vmem [resolvable:$true] %s197
          %203 = dma.hbm_to_vmem [thread:$0]  %s196, 1024, %s198, %s188, 256, 128, 8
        $region36: #{tpu_custom_call.1} parent=31 // pred_fallthru
          _
      $region32: #{tpu_custom_call.1} parent=5 // pred_fallthru
        _
      %p204 = scmp.le.s32.totalorder 1, %s17
      %p205 = scmp.lt.s32.totalorder %s17, 3
      %p206 = pnand %p204, %p205
      %p207 = pneg %p206
      // Predicated region
      $region37: #{tpu_custom_call.1} parent=5 // pred_check
        _
      $region38: #{tpu_custom_call.1} parent=5 // pred_check_branch
        %209 = sbr.rel (%p206) target = $region40
      $region39: #{tpu_custom_call.1} parent=5 // pred_region
        %s210 = ssub.s32 %s17, 1
        %s211 = sand.u32 %s30, 1
        %s212 = scalar_lea.sflag [#allocation3], %s211
        %s213 = sand.u32 %s30, 1
        %s214 = smul.addr %s213, 64
        %s215 = scalar_lea.vmem [#allocation2], %s214
        // Predicated region
        $region41: #{tpu_custom_call.1} parent=39 // pred_check
          %p216 = pneg %p43
        $region42: #{tpu_custom_call.1} parent=39 // pred_check_branch
          %218 = sbr.rel (%p216) target = $region44
        $region43: #{tpu_custom_call.1} parent=39 // pred_region
          %219 = dma.done %s212, 1024
        $region44: #{tpu_custom_call.1} parent=39 // pred_fallthru
          _
        %s220 = sand.u32 %s30, 1
        %s221 = scalar_lea.sflag [#allocation3], %s220
        %s222 = sand.u32 %s30, 1
        %s223 = smul.addr %s222, 64
        %s224 = scalar_lea.vmem [#allocation2], %s223
        %p225 = pneg %p43
        %p226 = pneg %p40
        %p227 = pneg %p64
        %p228 = pneg %p61
        %p229 = pneg %p85
        %p230 = pneg %p82
        %p231 = pneg %p106
        %p232 = pneg %p103
        %p233 = pneg %p127
        %p234 = pneg %p124
        %p235 = pneg %p153
        %p236 = pneg %p150
        %s237 = sand.u32 %s140, 1
        %s238 = scalar_lea.sflag [#allocation4], %s237
        %s239 = sand.u32 %s140, 1
        %s240 = smul.addr %s239, 8
        %s241 = scalar_lea.vmem [#allocation5], %s240
        %v242 = vld [vmem:[%s215] sm:$0xff]
        %v243 = vld [vmem:[%s215 + $0x8] sm:$0xff]
        %v244 = vld [vmem:[%s215 + $0x10] sm:$0xff]
        %v245 = vld [vmem:[%s215 + $0x18] sm:$0xff]
        %v246 = vld [vmem:[%s215 + $0x20] sm:$0xff]
        %v247 = vld [vmem:[%s215 + $0x28] sm:$0xff]
        %v248 = vld [vmem:[%s215 + $0x30] sm:$0xff]
        %v249 = vld [vmem:[%s215 + $0x38] sm:$0xff]
        %v250 = vld [vmem:[%s1] sm:$0xff]
        %v251 = vld [vmem:[%s1 + $0x8] sm:$0xff]
        %v252 = vld [vmem:[%s1 + $0x10] sm:$0xff]
        %v253 = vld [vmem:[%s1 + $0x18] sm:$0xff]
        %v254 = vld [vmem:[%s1 + $0x20] sm:$0xff]
        %v255 = vld [vmem:[%s1 + $0x28] sm:$0xff]
        %v256 = vld [vmem:[%s1 + $0x30] sm:$0xff]
        %v257 = vld [vmem:[%s1 + $0x38] sm:$0xff]
        %v258 = vld [vmem:[%s2] sm:$0x1]
        %v260 = vlaneseq
        %v261 = vshrl.u32 %v260, 7
        %v262 = vsub.s32 0, %v261
        %v263 = vrot.slane %v258, %v262
        %vm265 = vcmask 523264
        %v267 = vsel %vm265, %v242, 0
        %v270 = vsel %vm265, %v243, 0
        %v273 = vsel %vm265, %v244, 0
        %v276 = vsel %vm265, %v245, 0
        %v279 = vsel %vm265, %v246, 0
        %v282 = vsel %vm265, %v247, 0
        %v285 = vsel %vm265, %v248, 0
        %v288 = vsel %vm265, %v249, 0
        %290 = vmatprep.subr.mxu0 0.0
        %291 = vmatpush1.msra.mxu0 %v250
        %292 = vmatprep.subr.mxu0 0.0
        %293 = vmatpush1.msra.mxu0 %v251
        %294 = vmatprep.subr.mxu0 0.0
        %295 = vmatpush1.msra.mxu0 %v252
        %296 = vmatprep.subr.mxu0 0.0
        %297 = vmatpush1.msra.mxu0 %v253
        %298 = vmatprep.subr.mxu0 0.0
        %299 = vmatpush1.msra.mxu0 %v254
        %300 = vmatprep.subr.mxu0 0.0
        %301 = vmatpush1.msra.mxu0 %v255
        %302 = vmatprep.subr.mxu0 0.0
        %303 = vmatpush1.msra.mxu0 %v256
        %304 = vmatprep.subr.mxu0 0.0
        %305 = vmatpush1.msra.mxu0 %v257
        %306 = vmatprep.subr.mxu0 0.0
        %307 = vmatpush1.msra.mxu0 0.0
        %308 = vmatprep.subr.mxu0 0.0
        %309 = vmatpush1.msra.mxu0 0.0
        %310 = vmatprep.subr.mxu0 0.0
        %311 = vmatpush1.msra.mxu0 0.0
        %312 = vmatprep.subr.mxu0 0.0
        %313 = vmatpush1.msra.mxu0 0.0
        %314 = vmatprep.subr.mxu0 0.0
        %315 = vmatpush1.msra.mxu0 0.0
        %316 = vmatprep.subr.mxu0 0.0
        %317 = vmatpush1.msra.mxu0 0.0
        %318 = vmatprep.subr.mxu0 0.0
        %319 = vmatpush1.msra.mxu0 0.0
        %320 = vmatprep.subr.mxu0 0.0
        %321 = vmatpush1.msra.mxu0 0.0
        %322 = vmatprep.subr.mxu0 0.0
        %323 = vmatpush1.msra.mxu0 0.0
        %324 = vmatprep.subr.mxu0 0.0
        %325 = vmatpush1.msra.mxu0 0.0
        %326 = vmatprep.subr.mxu0 0.0
        %327 = vmatpush1.msra.mxu0 0.0
        %328 = vmatprep.subr.mxu0 0.0
        %329 = vmatpush1.msra.mxu0 0.0
        %330 = vmatprep.subr.mxu0 0.0
        %331 = vmatpush1.msra.mxu0 0.0
        %332 = vmatprep.subr.mxu0 0.0
        %333 = vmatpush1.msra.mxu0 0.0
        %334 = vmatprep.subr.mxu0 0.0
        %335 = vmatpush1.msra.mxu0 0.0
        %336 = vmatprep.subr.mxu0 0.0
        %337 = vmatpush1.msra.mxu0 0.0
        %338 = vmatprep.subr.mxu0 0.0
        %339 = vmatpush1.msra.mxu0 0.0
        %340 = vmatprep.subr.mxu0 0.0
        %341 = vmatpush1.msra.mxu0 0.0
        %342 = vmatprep.subr.mxu0 0.0
        %343 = vmatpush1.msra.mxu0 0.0
        %344 = vmatprep.subr.mxu0 0.0
        %345 = vmatpush1.msra.mxu0 0.0
        %346 = vmatprep.subr.mxu0 0.0
        %347 = vmatpush1.msra.mxu0 0.0
        %348 = vmatprep.subr.mxu0 0.0
        %349 = vmatpush1.msra.mxu0 0.0
        %350 = vmatprep.subr.mxu0 0.0
        %351 = vmatpush1.msra.mxu0 0.0
        %352 = vmatprep.subr.mxu0 0.0
        %353 = vmatpush1.msra.mxu0 0.0
        %354 = vmatprep.mubr.f32.mxu0 0.0
        %355 = vmatmul.mubr.f32.gmra.mrb[0].mxu0 %v267
        %v356 = vpop.f32.mrb[0].mxu0
        %v357 = vadd.f32 %v263, %v356
        %v358 = vpop.f32.mrb[0].mxu0
        %359 = vmatprep.mubr.f32.mxu0 0.0
        %360 = vmatmul.mubr.f32.gmra.mrb[0].mxu0 %v270
        %v361 = vpop.f32.mrb[0].mxu0
        %v362 = vadd.f32 %v263, %v361
        %v363 = vpop.f32.mrb[0].mxu0
        %364 = vmatprep.mubr.f32.mxu0 0.0
        %365 = vmatmul.mubr.f32.gmra.mrb[0].mxu0 %v273
        %v366 = vpop.f32.mrb[0].mxu0
        %v367 = vadd.f32 %v263, %v366
        %v368 = vpop.f32.mrb[0].mxu0
        %369 = vmatprep.mubr.f32.mxu0 0.0
        %370 = vmatmul.mubr.f32.gmra.mrb[0].mxu0 %v276
        %v371 = vpop.f32.mrb[0].mxu0
        %v372 = vadd.f32 %v263, %v371
        %v373 = vpop.f32.mrb[0].mxu0
        %374 = vmatprep.mubr.f32.mxu0 0.0
        %375 = vmatmul.mubr.f32.gmra.mrb[0].mxu0 %v279
        %v376 = vpop.f32.mrb[0].mxu0
        %v377 = vadd.f32 %v263, %v376
        %v378 = vpop.f32.mrb[0].mxu0
        %379 = vmatprep.mubr.f32.mxu0 0.0
        %380 = vmatmul.mubr.f32.gmra.mrb[0].mxu0 %v282
        %v381 = vpop.f32.mrb[0].mxu0
        %v382 = vadd.f32 %v263, %v381
        %v383 = vpop.f32.mrb[0].mxu0
        %384 = vmatprep.mubr.f32.mxu0 0.0
        %385 = vmatmul.mubr.f32.gmra.mrb[0].mxu0 %v285
        %v386 = vpop.f32.mrb[0].mxu0
        %v387 = vadd.f32 %v263, %v386
        %v388 = vpop.f32.mrb[0].mxu0
        %389 = vmatprep.mubr.f32.mxu0 0.0
        %390 = vmatmul.mubr.f32.gmra.mrb[0].mxu0 %v288
        %v391 = vpop.f32.mrb[0].mxu0
        %v392 = vadd.f32 %v263, %v391
        %v393 = vpop.f32.mrb[0].mxu0
        %394 = vdwg.mxu0
        %v395 = vmax.f32 %v357, 0.0
        %v396 = vmax.f32 %v362, 0.0
        %v397 = vmax.f32 %v367, 0.0
        %v398 = vmax.f32 %v372, 0.0
        %v399 = vmax.f32 %v377, 0.0
        %v400 = vmax.f32 %v382, 0.0
        %v401 = vmax.f32 %v387, 0.0
        %v402 = vmax.f32 %v392, 0.0
        %v403 = vsel %vm265, %v395, 0.0
        %v404 = vsel %vm265, %v396, 0.0
        %v405 = vadd.f32 %v403, %v404
        %v406 = vsel %vm265, %v397, 0.0
        %v407 = vadd.f32 %v405, %v406
        %v408 = vsel %vm265, %v398, 0.0
        %v409 = vadd.f32 %v407, %v408
        %v410 = vsel %vm265, %v399, 0.0
        %v411 = vadd.f32 %v409, %v410
        %v412 = vsel %vm265, %v400, 0.0
        %v413 = vadd.f32 %v411, %v412
        %v414 = vsel %vm265, %v401, 0.0
        %v415 = vadd.f32 %v413, %v414
        %v416 = vsel %vm265, %v402, 0.0
        %v417 = vadd.f32 %v415, %v416
        %v418 = vmul.f32 %v417, 0.125
        %v419 = vld [vmem:[%s3] sm:$0xff]
        %v420 = vld [vmem:[%s3 + $0x8] sm:$0xff]
        %v421 = vld [vmem:[%s3 + $0x10] sm:$0xff]
        %v422 = vld [vmem:[%s3 + $0x18] sm:$0xff]
        %v423 = vld [vmem:[%s3 + $0x20] sm:$0xff]
        %v424 = vld [vmem:[%s3 + $0x28] sm:$0xff]
        %v425 = vld [vmem:[%s3 + $0x30] sm:$0xff]
        %v426 = vld [vmem:[%s3 + $0x38] sm:$0xff]
        %v427 = vld [vmem:[%s4] sm:$0x1]
        %v429 = vlaneseq
        %v430 = vshrl.u32 %v429, 7
        %v431 = vsub.s32 0, %v430
        %v432 = vrot.slane %v427, %v431
        %v435 = vsel %vm265, %v418, 0
        %437 = vmatprep.subr.mxu0 0.0
        %438 = vmatpush1.msra.mxu0 %v419
        %439 = vmatprep.subr.mxu0 0.0
        %440 = vmatpush1.msra.mxu0 %v420
        %441 = vmatprep.subr.mxu0 0.0
        %442 = vmatpush1.msra.mxu0 %v421
        %443 = vmatprep.subr.mxu0 0.0
        %444 = vmatpush1.msra.mxu0 %v422
        %445 = vmatprep.subr.mxu0 0.0
        %446 = vmatpush1.msra.mxu0 %v423
        %447 = vmatprep.subr.mxu0 0.0
        %448 = vmatpush1.msra.mxu0 %v424
        %449 = vmatprep.subr.mxu0 0.0
        %450 = vmatpush1.msra.mxu0 %v425
        %451 = vmatprep.subr.mxu0 0.0
        %452 = vmatpush1.msra.mxu0 %v426
        %453 = vmatprep.subr.mxu0 0.0
        %454 = vmatpush1.msra.mxu0 0.0
        %455 = vmatprep.subr.mxu0 0.0
        %456 = vmatpush1.msra.mxu0 0.0
        %457 = vmatprep.subr.mxu0 0.0
        %458 = vmatpush1.msra.mxu0 0.0
        %459 = vmatprep.subr.mxu0 0.0
        %460 = vmatpush1.msra.mxu0 0.0
        %461 = vmatprep.subr.mxu0 0.0
        %462 = vmatpush1.msra.mxu0 0.0
        %463 = vmatprep.subr.mxu0 0.0
        %464 = vmatpush1.msra.mxu0 0.0
        %465 = vmatprep.subr.mxu0 0.0
        %466 = vmatpush1.msra.mxu0 0.0
        %467 = vmatprep.subr.mxu0 0.0
        %468 = vmatpush1.msra.mxu0 0.0
        %469 = vmatprep.subr.mxu0 0.0
        %470 = vmatpush1.msra.mxu0 0.0
        %471 = vmatprep.subr.mxu0 0.0
        %472 = vmatpush1.msra.mxu0 0.0
        %473 = vmatprep.subr.mxu0 0.0
        %474 = vmatpush1.msra.mxu0 0.0
        %475 = vmatprep.subr.mxu0 0.0
        %476 = vmatpush1.msra.mxu0 0.0
        %477 = vmatprep.subr.mxu0 0.0
        %478 = vmatpush1.msra.mxu0 0.0
        %479 = vmatprep.subr.mxu0 0.0
        %480 = vmatpush1.msra.mxu0 0.0
        %481 = vmatprep.subr.mxu0 0.0
        %482 = vmatpush1.msra.mxu0 0.0
        %483 = vmatprep.subr.mxu0 0.0
        %484 = vmatpush1.msra.mxu0 0.0
        %485 = vmatprep.subr.mxu0 0.0
        %486 = vmatpush1.msra.mxu0 0.0
        %487 = vmatprep.subr.mxu0 0.0
        %488 = vmatpush1.msra.mxu0 0.0
        %489 = vmatprep.subr.mxu0 0.0
        %490 = vmatpush1.msra.mxu0 0.0
        %491 = vmatprep.subr.mxu0 0.0
        %492 = vmatpush1.msra.mxu0 0.0
        %493 = vmatprep.subr.mxu0 0.0
        %494 = vmatpush1.msra.mxu0 0.0
        %495 = vmatprep.subr.mxu0 0.0
        %496 = vmatpush1.msra.mxu0 0.0
        %497 = vmatprep.subr.mxu0 0.0
        %498 = vmatpush1.msra.mxu0 0.0
        %499 = vmatprep.subr.mxu0 0.0
        %500 = vmatpush1.msra.mxu0 0.0
        %501 = vmatprep.mubr.f32.mxu0 0.0
        %502 = vmatmul.mubr.f32.gmra.mrb[0].mxu0 %v435
        %v503 = vpop.f32.mrb[0].mxu0
        %v504 = vadd.f32 %v432, %v503
        %v505 = vpop.f32.mrb[0].mxu0
        %506 = vdwg.mxu0
        %v507 = vsub.f32 0.0, %v504
        %v508 = vmul.f32 %v507, 1.442695
        %v509 = vpow.pop %v508
        %v510 = vadd.f32 %v509, 1.0
        %v511 = vrcp.pop %v510
        %v512 = vmul.f32 1.0, %v511
        %vm513 = vcmask 523520
        %v514 = vsel %vm513, %v242, inf
        %v515 = vsel %vm513, %v243, inf
        %v516 = vsel %vm513, %v244, inf
        %v517 = vsel %vm513, %v245, inf
        %v518 = vsel %vm513, %v246, inf
        %v519 = vmin.f32 %v514, %v518
        %v520 = vsel %vm513, %v247, inf
        %v521 = vmin.f32 %v515, %v520
        %v522 = vsel %vm513, %v248, inf
        %v523 = vmin.f32 %v516, %v522
        %v524 = vsel %vm513, %v249, inf
        %v525 = vmin.f32 %v517, %v524
        %v526 = vmin.f32 %v519, %v521
        %v527 = vmin.f32 %v523, %v525
        %v528 = vmin.f32 %v526, %v527
        %530 = vrot.lane.b32.xlu0 %v512, 32
        %v531 = vpop.permute.xlu0 %530
        %v533 = vmul.f32 %v528, %v531
        %535 = vrot.lane.b32.xlu0 %v533, 96
        %v536 = vpop.permute.xlu0 %535
        %vm538 = vcmask 261120
        %539 = vst.msk [vmem:[%s241] sm:$0xff] %vm538, %v536
        %s540 = sand.u32 %s140, 1
        %s541 = scalar_lea.sflag [#allocation4], %s540
        %s542 = sand.u32 %s140, 1
        %s543 = smul.addr %s542, 8
        %s544 = scalar_lea.vmem [#allocation5], %s543
        // Predicated region
        $region45: #{tpu_custom_call.1} parent=39 // pred_check
          %p545 = pneg %p150
        $region46: #{tpu_custom_call.1} parent=39 // pred_check_branch
          %547 = sbr.rel (%p545) target = $region48
        $region47: #{tpu_custom_call.1} parent=39 // pred_region
          %s549 = ssub.s32 128, 128
          %550 = vsyncadd %s541, %s549
          %s551 = smul.addr %s22, 128
          %s552 = scalar_lea.hbm %s5, %s551
          %s554 = sshll.u32 %s544, 4
          %s555 = int_to_ptr.vmem [resolvable:$true] %s554
          %557 = dma.vmem_to_hbm [thread:$0]  %s555, 128, %s552, %s541
        $region48: #{tpu_custom_call.1} parent=39 // pred_fallthru
          _
      $region40: #{tpu_custom_call.1} parent=5 // pred_fallthru
        _
      %p558 = scmp.le.s32.totalorder 2, %s17
      // Predicated region
      $region49: #{tpu_custom_call.1} parent=5 // pred_check
        %p559 = pneg %p558
      $region50: #{tpu_custom_call.1} parent=5 // pred_check_branch
        %561 = sbr.rel (%p559) target = $region52
      $region51: #{tpu_custom_call.1} parent=5 // pred_region
        %s562 = ssub.s32 %s17, 2
        // Predicated region
        $region53: #{tpu_custom_call.1} parent=51 // pred_check
          %p563 = pneg %p156
        $region54: #{tpu_custom_call.1} parent=51 // pred_check_branch
          %565 = sbr.rel (%p563) target = $region56
        $region55: #{tpu_custom_call.1} parent=51 // pred_region
          %s566 = sand.u32 %s141, 1
          %s567 = scalar_lea.sflag [#allocation4], %s566
          %s568 = sand.u32 %s141, 1
          %s569 = smul.addr %s568, 8
          %s570 = scalar_lea.vmem [#allocation5], %s569
          %571 = dma.done %s567, 128
        $region56: #{tpu_custom_call.1} parent=51 // pred_fallthru
          _
      $region52: #{tpu_custom_call.1} parent=5 // pred_fallthru
        _
    $region6: #{tpu_custom_call.1} parent=1 // loop_footer
      %s21 = sadd.s32 1, %s17
    $region7: #{tpu_custom_call.1} parent=1 // loop_footer_branch
      %16 = sbr.rel target = $region3
    $region8: #{tpu_custom_call.1} parent=1 // loop_exit
      _
    %572 = vsyncpa [#allocation3], 1
    %s573 = scalar_lea.sflag [#allocation3], 1
    %574 = vsyncpa %s573, 1
    %575 = vsyncpa [#allocation4], 1
    %s576 = scalar_lea.sflag [#allocation4], 1
    %577 = vsyncpa %s576, 1

</llo_original>
